<compile_context>
chip_gen: v7x
topology: tpu7x:2x2x1
jax: 0.10.0
libtpu: 0.0.40
codegen_flags: <defaults>
</compile_context>

<pallas_src>
import jax
import jax.numpy as jnp
import numpy as np
from jax import lax
from jax.experimental import pallas as pl
from jax.experimental.pallas import tpu as pltpu

# SMARTLoss hyper-parameters (PyTorch defaults)
NUM_STEPS = 1
STEP_SIZE = 1e-3
EPSILON = 1e-6
NOISE_VAR = 1e-5


def _make_smart_loss_kernel(g_scale):
    """g_scale = 2 * step_size / (B_total * C) (full-batch mean-MSE gradient)."""

    def kernel(embed_ref, state_ref, noise_ref, w_ref, wt_ref, out_ref):
        embed = embed_ref[...]                      # (TB, H) f32
        state = state_ref[...]                      # (TB, C) f32, bias pre-folded
        w = w_ref[...]                              # (H, C) matmul dtype, resident
        wt = wt_ref[...]                            # (C, H) matmul dtype, resident

        # noise = randn_like(embed) * noise_var (std-normal randoms from wrapper)
        noise0 = noise_ref[...] * NOISE_VAR

        def predict(noise):
            x = (embed + noise).astype(w.dtype)     # elementwise math stays f32
            return jnp.dot(x, w, preferred_element_type=jnp.float32)

        def adv_step(_, noise):
            diff = predict(noise) - state           # (TB, C) f32
            # closed-form grad; W^T passed pre-transposed -> plain MXU matmul,
            # no per-grid-step relayout of the weights.
            g = jnp.dot(diff.astype(wt.dtype), wt,
                        preferred_element_type=jnp.float32)   # (TB, H)
            step = noise + g_scale * g
            # inf_norm: max |.| over last dim, keepdim
            step_norm = jnp.max(jnp.abs(step), axis=-1, keepdims=True)
            # divide -> EUP approximate reciprocal (frees the VALU slot)
            return step * pl.reciprocal(step_norm + EPSILON, approx=True)

        noise = lax.fori_loop(0, NUM_STEPS, adv_step, noise0, unroll=True)

        # i == num_steps: loss_last_fn(eval_fn(embed + noise), state) == mean MSE.
        # Emit only this block's partial sum as a lane-dense (1, C) row; the
        # wrapper finishes the cross-block sum and the mean.
        diff = predict(noise) - state
        out_ref[0] = jnp.sum(diff * diff, axis=0, keepdims=True)

    return kernel


def smart_loss(embed, state, noise, w, b, *, block_b=None,
               matmul_dtype=jnp.bfloat16):
    """SMART regularization loss (linear eval head, MSE loss, inf-norm).

    embed:(B,H), state:(B,C), noise:(B,H) std-normal randoms, w:(H,C), b:(C,).
    matmul_dtype=bf16 (default) feeds the MXU at its native rate on
    v5e/v6e/v7x; elementwise math stays f32.
    """
    B, H = embed.shape
    Bs, C = state.shape
    assert Bs == B and w.shape == (H, C) and noise.shape == (B, H)
    assert b.shape == (C,)

    if block_b is None:
        # Whole batch per grid step when it comfortably fits VMEM (amortizes the
        # ~0.35 us per-grid-step overhead); cap huge batches.  On v5e prefer
        # 256-512 (single vector-store slot -> spill stores bind earlier).
        block_b = B if B <= 1024 else max(
            (c for c in (1024, 512, 256, 128, 64, 8) if B % c == 0), default=B)
    block_b = min(block_b, B)
    assert B % block_b == 0, "batch must be divisible by block_b"
    assert block_b % 8 == 0 or block_b == B, "block_b must be a multiple of 8"
    grid = (B // block_b,)

    inv_n = 1.0 / (B * C)                 # mean-MSE over the FULL batch
    g_scale = 2.0 * inv_n * STEP_SIZE     # hoisted gradient scale

    # Cast weights once in the wrapper (not per grid step inside the kernel)
    # and pre-transpose W so both matmuls hit the MXU in canonical layout.
    w_mm = w.astype(matmul_dtype)
    wt_mm = w.T.astype(matmul_dtype)
    # Fold the bias into the target: MSE((x@W + b) - state) == MSE(x@W - (state - b)),
    # and the same identity holds for the noise gradient.  Removes one input
    # stream and the per-step broadcast.
    state_adj = state - b[None, :]

    # TODO(synk): optionally store embed/state/noise as bf16 in HBM to halve the
    # dominant streaming traffic once HBM-bound (re-validate tolerances).

    n_matmuls = 2 * NUM_STEPS + 1          # pred + grad per step, final pred
    itemsize_w = np.dtype(matmul_dtype).itemsize
    cost = pl.CostEstimate(
        flops=2 * B * H * C * n_matmuls,
        transcendentals=B * NUM_STEPS,     # approximate reciprocals
        bytes_accessed=4 * (2 * B * H + B * C)
                       + 2 * itemsize_w * H * C
                       + 4 * grid[0] * C,
    )

    kernel = _make_smart_loss_kernel(g_scale)

    partials = pl.pallas_call(
        kernel,
        out_shape=jax.ShapeDtypeStruct((grid[0], 1, C), jnp.float32),
        grid_spec=pltpu.PrefetchScalarGridSpec(
            num_scalar_prefetch=0,
            grid=grid,
            in_specs=[
                pl.BlockSpec((block_b, H), lambda i: (i, 0)),   # embed tile
                pl.BlockSpec((block_b, C), lambda i: (i, 0)),   # state tile (bias folded)
                pl.BlockSpec((block_b, H), lambda i: (i, 0)),   # noise tile
                pl.BlockSpec((H, C), lambda i: (0, 0)),         # W,   grid-resident
                pl.BlockSpec((C, H), lambda i: (0, 0)),         # W^T, grid-resident
            ],
            # One lane-dense partial-sum row per batch block.
            out_specs=pl.BlockSpec((1, 1, C), lambda i: (i, 0, 0)),
        ),
        compiler_params=pltpu.CompilerParams(
            # Batch blocks are independent (per-block partial sums, no shared
            # accumulator) -> "parallel"; lets v7x shard blocks across its two
            # TensorCores.  No-op on single-TC v5e/v6e.
            dimension_semantics=("parallel",),
            vmem_limit_bytes=32 * 1024 * 1024,
        ),
        cost_estimate=cost,
    )(embed, state_adj, noise, w_mm, wt_mm)

    return jnp.sum(partials) * inv_n


def smart_loss_ref(embed, state, noise, w, b):
    """Pure-JAX reference of the same math (exact f32, exact division)."""
    hp = jax.lax.Precision.HIGHEST
    B, C = state.shape
    inv_n = 1.0 / (B * C)
    n = noise * NOISE_VAR
    for _ in range(NUM_STEPS):
        pred = jnp.dot(embed + n, w, precision=hp) + b
        diff = pred - state
        grad = (2.0 * inv_n) * jnp.dot(diff, w.T, precision=hp)
        step = n + STEP_SIZE * grad
        step_norm = jnp.max(jnp.abs(step), axis=-1, keepdims=True)
        n = step / (step_norm + EPSILON)
    pred = jnp.dot(embed + n, w, precision=hp) + b
    return jnp.mean((pred - state) ** 2)


if __name__ == "__main__":
    # Lane-dense small shapes: H = C = 128 (full lane width), B multiple of 8.
    B, H, C = 256, 128, 128

    key = jax.random.PRNGKey(0)
    k_embed, k_w, k_b, k_noise, k_state = jax.random.split(key, 5)

    embed = jax.random.normal(k_embed, (B, H), dtype=jnp.float32)
    w = jax.random.normal(k_w, (H, C), dtype=jnp.float32) * 0.1
    b = 0.1 * jax.random.normal(k_b, (C,), dtype=jnp.float32)
    noise = jax.random.normal(k_noise, (B, H), dtype=jnp.float32)
    # state: clean-model output (typical SMART usage) plus a perturbation so
    # the loss is non-trivial.
    state = (jnp.dot(embed, w, precision=jax.lax.Precision.HIGHEST) + b
             + 0.5 * jax.random.normal(k_state, (B, C), jnp.float32))

    ref = smart_loss_ref(embed, state, noise, w, b)

    # Default path: bf16 MXU operands, whole batch in a single grid step.
    out = jax.block_until_ready(smart_loss(embed, state, noise, w, b))
    np.testing.assert_allclose(np.asarray(out), np.asarray(ref),
                               rtol=1e-2, atol=1e-5)

    # Multi-block path: per-block partial sums, "parallel" batch axis.
    out_blk = jax.block_until_ready(
        smart_loss(embed, state, noise, w, b, block_b=64))
    np.testing.assert_allclose(np.asarray(out_blk), np.asarray(ref),
                               rtol=1e-2, atol=1e-5)

    # Full-f32 MXU path (tighter tolerance: only the approx reciprocal differs).
    out_f32 = jax.block_until_ready(
        smart_loss(embed, state, noise, w, b, matmul_dtype=jnp.float32))
    np.testing.assert_allclose(np.asarray(out_f32), np.asarray(ref),
                               rtol=5e-3, atol=1e-6)

    print("KERNEL_OK")
</pallas_src>

<mosaic_0001>
module attributes {stable_mosaic.version = 11 : i64} {
  func.func @kernel(%arg0: i32, %arg1: memref<256x128xf32, #tpu.memory_space<vmem>>, %arg2: memref<256x128xf32, #tpu.memory_space<vmem>>, %arg3: memref<256x128xf32, #tpu.memory_space<vmem>>, %arg4: memref<128x128xbf16, #tpu.memory_space<vmem>>, %arg5: memref<128x128xbf16, #tpu.memory_space<vmem>>, %arg6: memref<1x1x128xf32, #tpu.memory_space<vmem>>) attributes {dimension_semantics = [#tpu.dimension_semantics<parallel>], iteration_bounds = array<i64: 1>, scalar_prefetch = 0 : i64, scratch_operands = 0 : i64, tpu.core_type = #tpu.core_type<tc>, window_params = [{transform_indices = @transform_0, window_bounds = array<i64: 256, 128>}, {transform_indices = @transform_1, window_bounds = array<i64: 256, 128>}, {transform_indices = @transform_2, window_bounds = array<i64: 256, 128>}, {pipeline_mode = #tpu.pipeline_mode<synchronous>, transform_indices = @transform_3, window_bounds = array<i64: 128, 128>}, {pipeline_mode = #tpu.pipeline_mode<synchronous>, transform_indices = @transform_4, window_bounds = array<i64: 128, 128>}, {transform_indices = @transform_5, window_bounds = array<i64: 1, 1, 128>}]} {
    %c0 = arith.constant 0 : index
    %c0_0 = arith.constant 0 : index
    %0 = vector.load %arg1[%c0, %c0_0] : memref<256x128xf32, #tpu.memory_space<vmem>>, vector<256x128xf32>
    %c0_1 = arith.constant 0 : index
    %c0_2 = arith.constant 0 : index
    %1 = vector.load %arg2[%c0_1, %c0_2] : memref<256x128xf32, #tpu.memory_space<vmem>>, vector<256x128xf32>
    %c0_3 = arith.constant 0 : index
    %c0_4 = arith.constant 0 : index
    %2 = vector.load %arg4[%c0_3, %c0_4] : memref<128x128xbf16, #tpu.memory_space<vmem>>, vector<128x128xbf16>
    %c0_5 = arith.constant 0 : index
    %c0_6 = arith.constant 0 : index
    %3 = vector.load %arg5[%c0_5, %c0_6] : memref<128x128xbf16, #tpu.memory_space<vmem>>, vector<128x128xbf16>
    %c0_7 = arith.constant 0 : index
    %c0_8 = arith.constant 0 : index
    %4 = vector.load %arg3[%c0_7, %c0_8] : memref<256x128xf32, #tpu.memory_space<vmem>>, vector<256x128xf32>
    %cst = arith.constant 9.99999974E-6 : f32
    %5 = vector.broadcast %cst : f32 to vector<256x128xf32>
    %6 = arith.mulf %4, %5 : vector<256x128xf32>
    %c0_i32 = arith.constant 0 : i32
    %7 = arith.addf %0, %6 : vector<256x128xf32>
    %8 = arith.truncf %7 : vector<256x128xf32> to vector<256x128xbf16>
    %cst_9 = arith.constant dense<0.000000e+00> : vector<256x128xf32>
    %9 = tpu.matmul %8, %2, %cst_9 {dimension_numbers = #tpu.dot_dimension_numbers<[1], [0], [0], [1], [0, 0, 1, 1], [], []>} : vector<256x128xbf16>, vector<128x128xbf16>, vector<256x128xf32> -> vector<256x128xf32>
    %10 = arith.subf %9, %1 : vector<256x128xf32>
    %11 = arith.truncf %10 : vector<256x128xf32> to vector<256x128xbf16>
    %cst_10 = arith.constant dense<0.000000e+00> : vector<256x128xf32>
    %12 = tpu.matmul %11, %3, %cst_10 {dimension_numbers = #tpu.dot_dimension_numbers<[1], [0], [0], [1], [0, 0, 1, 1], [], []>} : vector<256x128xbf16>, vector<128x128xbf16>, vector<256x128xf32> -> vector<256x128xf32>
    %cst_11 = arith.constant 6.10351591E-8 : f32
    %13 = vector.broadcast %cst_11 : f32 to vector<256x128xf32>
    %14 = arith.mulf %13, %12 : vector<256x128xf32>
    %15 = arith.addf %6, %14 : vector<256x128xf32>
    %16 = math.absf %15 : vector<256x128xf32>
    %cst_12 = arith.constant dense<0xFF800000> : vector<256xf32>
    %17 = vector.multi_reduction <maximumf>, %16, %cst_12 [1] : vector<256x128xf32> to vector<256xf32>
    %18 = vector.shape_cast %17 : vector<256xf32> to vector<256x1xf32>
    %cst_13 = arith.constant 9.99999997E-7 : f32
    %19 = vector.broadcast %cst_13 : f32 to vector<256x1xf32>
    %20 = arith.addf %18, %19 : vector<256x1xf32>
    %21 = tpu.reciprocal %20 {approx = true} : vector<256x1xf32> -> vector<256x1xf32>
    %22 = vector.broadcast %21 : vector<256x1xf32> to vector<256x128xf32>
    %23 = arith.mulf %15, %22 : vector<256x128xf32>
    %24 = arith.addf %0, %23 : vector<256x128xf32>
    %25 = arith.truncf %24 : vector<256x128xf32> to vector<256x128xbf16>
    %cst_14 = arith.constant dense<0.000000e+00> : vector<256x128xf32>
    %26 = tpu.matmul %25, %2, %cst_14 {dimension_numbers = #tpu.dot_dimension_numbers<[1], [0], [0], [1], [0, 0, 1, 1], [], []>} : vector<256x128xbf16>, vector<128x128xbf16>, vector<256x128xf32> -> vector<256x128xf32>
    %27 = arith.subf %26, %1 : vector<256x128xf32>
    %28 = arith.mulf %27, %27 : vector<256x128xf32>
    %cst_15 = arith.constant dense<0.000000e+00> : vector<128xf32>
    %29 = vector.multi_reduction <add>, %28, %cst_15 [0] : vector<256x128xf32> to vector<128xf32>
    %30 = vector.shape_cast %29 : vector<128xf32> to vector<1x128xf32>
    %c0_16 = arith.constant 0 : index
    %c0_17 = arith.constant 0 : index
    %c0_18 = arith.constant 0 : index
    %31 = vector.load %arg6[%c0_16, %c0_17, %c0_18] : memref<1x1x128xf32, #tpu.memory_space<vmem>>, vector<1x1x128xf32>
    %32 = vector.shape_cast %31 : vector<1x1x128xf32> to vector<1x128xf32>
    %33 = vector.shape_cast %30 : vector<1x128xf32> to vector<1x1x128xf32>
    tpu.vector_store %arg6[%c0_16, %c0_17, %c0_18], %33 {strides = array<i32>} : memref<1x1x128xf32, #tpu.memory_space<vmem>>, vector<1x1x128xf32>,
    return
  }
  func.func @transform_0(%arg0: i32) -> (i32, i32) {
    %c0_i32 = arith.constant 0 : i32
    %c0_i32_0 = arith.constant 0 : i32
    return %arg0, %c0_i32 : i32, i32
  }
  func.func @transform_1(%arg0: i32) -> (i32, i32) {
    %c0_i32 = arith.constant 0 : i32
    %c0_i32_0 = arith.constant 0 : i32
    return %arg0, %c0_i32 : i32, i32
  }
  func.func @transform_2(%arg0: i32) -> (i32, i32) {
    %c0_i32 = arith.constant 0 : i32
    %c0_i32_0 = arith.constant 0 : i32
    return %arg0, %c0_i32 : i32, i32
  }
  func.func @transform_3(%arg0: i32) -> (i32, i32) {
    %c0_i32 = arith.constant 0 : i32
    %c0_i32_0 = arith.constant 0 : i32
    %c0_i32_1 = arith.constant 0 : i32
    return %c0_i32, %c0_i32_0 : i32, i32
  }
  func.func @transform_4(%arg0: i32) -> (i32, i32) {
    %c0_i32 = arith.constant 0 : i32
    %c0_i32_0 = arith.constant 0 : i32
    %c0_i32_1 = arith.constant 0 : i32
    return %c0_i32, %c0_i32_0 : i32, i32
  }
  func.func @transform_5(%arg0: i32) -> (i32, i32, i32) {
    %c0_i32 = arith.constant 0 : i32
    %c0_i32_0 = arith.constant 0 : i32
    %c0_i32_1 = arith.constant 0 : i32
    return %arg0, %c0_i32, %c0_i32_0 : i32, i32, i32
  }
}

</mosaic_0001>

<llo_original>
// kernel: tpu_custom_call.1
$region0: #{tpu_custom_call.1}
  #allocation0 [shape = 'u32[]', space=smem, size = 0x4, offset = 0x4, fixed_abs, tag = 'smem constant byte address 0x4 - core index']
  #allocation1 [shape = 'u32[144,128]{1,0:T(1,128)}', space=vmem, size = 0x12000, scoped, tag = 'internal scratch']
  %s0 = inlined_call_operand.hbm [shape: f32[256,128], index: 0, kind: input, shape index: {}]
  %s1 = inlined_call_operand.hbm [shape: f32[256,128], index: 1, kind: input, shape index: {}]
  %s2 = inlined_call_operand.hbm [shape: f32[256,128], index: 2, kind: input, shape index: {}]
  %s3 = inlined_call_operand.hbm [shape: bf16[128,128], index: 3, kind: input, shape index: {}]
  %s4 = inlined_call_operand.hbm [shape: bf16[128,128], index: 4, kind: input, shape index: {}]
  %s5 = inlined_call_operand.hbm [shape: f32[1,1,128], index: 5, kind: output, shape index: {}]
  %s6 = sld [smem:[#allocation0]]
  $region50: #{tpu_custom_call.1} parent=0
    _
  %s8 = ssub.s32 1, %s6
  %s9 = scalar_select 0, %s8, %s6
  $region1: #{tpu_custom_call.1} parent=0
    #allocation2 [shape = 'u8[131072]{0}', space=vmem, size = 0x20000, scoped, tag = 'input window, operand 0, single buffered']
    #allocation3 [shape = 's32[1]{0}', space=sflag, size = 0x4, scoped, tag = 'scoped memory for tpu_custom_call.1']
    #allocation4 [shape = 's32[1]{0}', space=sflag, size = 0x4, scoped, tag = 'scoped memory for tpu_custom_call.1']
    #allocation5 [shape = 'u8[131072]{0}', space=vmem, size = 0x20000, scoped, tag = 'input window, operand 1, single buffered']
    #allocation6 [shape = 's32[1]{0}', space=sflag, size = 0x4, scoped, tag = 'scoped memory for tpu_custom_call.1']
    #allocation7 [shape = 'u8[131072]{0}', space=vmem, size = 0x20000, scoped, tag = 'input window, operand 2, single buffered']
    #allocation8 [shape = 'u8[32768]{0}', space=vmem, size = 0x8000, scoped, tag = 'input window, operand 3, single buffered']
    #allocation9 [shape = 's32[1]{0}', space=sflag, size = 0x4, scoped, tag = 'scoped memory for tpu_custom_call.1']
    #allocation10 [shape = 'u8[32768]{0}', space=vmem, size = 0x8000, scoped, tag = 'input window, operand 4, single buffered']
    #allocation11 [shape = 'u8[512]{0}', space=vmem, size = 0x400, scoped, tag = 'output window, operand 0, single buffered']
    %10 = vsyncpa [#allocation3], 0
    %11 = vsyncpa [#allocation6], 0
    %12 = vsyncpa [#allocation9], 0
    %13 = vsyncpa [#allocation4], 0
    // Predicated region
    $region2: #{tpu_custom_call.1} parent=1 // pred_check
      _
    $region3: #{tpu_custom_call.1} parent=1 // pred_check_branch
      %15 = sbr.rel (0) target = $region5
    $region4: #{tpu_custom_call.1} parent=1 // pred_region
      %s17 = ssub.s32 4096, 4096
      %18 = vsyncadd [#allocation3], %s17
      %s19 = sshll.u32 [#allocation2], 4
      %s20 = int_to_ptr.vmem [resolvable:$true] %s19
      %25 = dma.hbm_to_vmem [thread:$0]  %s0, 4096, %s20, [#allocation3], 128, 128, 8
    $region5: #{tpu_custom_call.1} parent=1 // pred_fallthru
      _
    // Predicated region
    $region6: #{tpu_custom_call.1} parent=1 // pred_check
      _
    $region7: #{tpu_custom_call.1} parent=1 // pred_check_branch
      %27 = sbr.rel (0) target = $region9
    $region8: #{tpu_custom_call.1} parent=1 // pred_region
      %s29 = ssub.s32 4096, 4096
      %30 = vsyncadd [#allocation6], %s29
      %s31 = sshll.u32 [#allocation5], 4
      %s32 = int_to_ptr.vmem [resolvable:$true] %s31
      %37 = dma.hbm_to_vmem [thread:$0]  %s1, 4096, %s32, [#allocation6], 128, 128, 8
    $region9: #{tpu_custom_call.1} parent=1 // pred_fallthru
      _
    // Predicated region
    $region10: #{tpu_custom_call.1} parent=1 // pred_check
      _
    $region11: #{tpu_custom_call.1} parent=1 // pred_check_branch
      %39 = sbr.rel (0) target = $region13
    $region12: #{tpu_custom_call.1} parent=1 // pred_region
      %s41 = ssub.s32 4096, 4096
      %42 = vsyncadd [#allocation6], %s41
      %s43 = sshll.u32 [#allocation7], 4
      %s44 = int_to_ptr.vmem [resolvable:$true] %s43
      %49 = dma.hbm_to_vmem [thread:$0]  %s2, 4096, %s44, [#allocation6], 128, 128, 8
    $region13: #{tpu_custom_call.1} parent=1 // pred_fallthru
      _
    // Predicated region
    $region14: #{tpu_custom_call.1} parent=1 // pred_check
      _
    $region15: #{tpu_custom_call.1} parent=1 // pred_check_branch
      %51 = sbr.rel (0) target = $region17
    $region16: #{tpu_custom_call.1} parent=1 // pred_region
      %s53 = ssub.s32 1024, 1024
      %54 = vsyncadd [#allocation9], %s53
      %s55 = sshll.u32 [#allocation8], 4
      %s56 = int_to_ptr.vmem [resolvable:$true] %s55
      %61 = dma.hbm_to_vmem [thread:$0]  %s3, 1024, %s56, [#allocation9], 64, 64, 4
    $region17: #{tpu_custom_call.1} parent=1 // pred_fallthru
      _
    // Predicated region
    $region18: #{tpu_custom_call.1} parent=1 // pred_check
      _
    $region19: #{tpu_custom_call.1} parent=1 // pred_check_branch
      %63 = sbr.rel (0) target = $region21
    $region20: #{tpu_custom_call.1} parent=1 // pred_region
      %s65 = ssub.s32 1024, 1024
      %66 = vsyncadd [#allocation9], %s65
      %s67 = sshll.u32 [#allocation10], 4
      %s68 = int_to_ptr.vmem [resolvable:$true] %s67
      %73 = dma.hbm_to_vmem [thread:$0]  %s4, 1024, %s68, [#allocation9], 64, 64, 4
    $region21: #{tpu_custom_call.1} parent=1 // pred_fallthru
      _
    // Predicated region
    $region22: #{tpu_custom_call.1} parent=1 // pred_check
      _
    $region23: #{tpu_custom_call.1} parent=1 // pred_check_branch
      %75 = sbr.rel (0) target = $region25
    $region24: #{tpu_custom_call.1} parent=1 // pred_region
      %76 = dma.done [#allocation3], 4096
    $region25: #{tpu_custom_call.1} parent=1 // pred_fallthru
      _
    // Predicated region
    $region26: #{tpu_custom_call.1} parent=1 // pred_check
      _
    $region27: #{tpu_custom_call.1} parent=1 // pred_check_branch
      %78 = sbr.rel (0) target = $region29
    $region28: #{tpu_custom_call.1} parent=1 // pred_region
      %79 = dma.done [#allocation6], 4096
    $region29: #{tpu_custom_call.1} parent=1 // pred_fallthru
      _
    // Predicated region
    $region30: #{tpu_custom_call.1} parent=1 // pred_check
      _
    $region31: #{tpu_custom_call.1} parent=1 // pred_check_branch
      %81 = sbr.rel (0) target = $region33
    $region32: #{tpu_custom_call.1} parent=1 // pred_region
      %82 = dma.done [#allocation6], 4096
    $region33: #{tpu_custom_call.1} parent=1 // pred_fallthru
      _
    // Predicated region
    $region34: #{tpu_custom_call.1} parent=1 // pred_check
      _
    $region35: #{tpu_custom_call.1} parent=1 // pred_check_branch
      %84 = sbr.rel (0) target = $region37
    $region36: #{tpu_custom_call.1} parent=1 // pred_region
      %85 = dma.done [#allocation9], 1024
    $region37: #{tpu_custom_call.1} parent=1 // pred_fallthru
      _
    // Predicated region
    $region38: #{tpu_custom_call.1} parent=1 // pred_check
      _
    $region39: #{tpu_custom_call.1} parent=1 // pred_check_branch
      %87 = sbr.rel (0) target = $region41
    $region40: #{tpu_custom_call.1} parent=1 // pred_region
      %88 = dma.done [#allocation9], 1024
    $region41: #{tpu_custom_call.1} parent=1 // pred_fallthru
      _
    %v90 = vld [vmem:[#allocation2] sm:$0xff]
    %v91 = vld [vmem:[#allocation2 + $0x8] sm:$0xff]
    %v92 = vld [vmem:[#allocation2 + $0x10] sm:$0xff]
    %v93 = vld [vmem:[#allocation2 + $0x18] sm:$0xff]
    %v94 = vld [vmem:[#allocation2 + $0x20] sm:$0xff]
    %v95 = vld [vmem:[#allocation2 + $0x28] sm:$0xff]
    %v96 = vld [vmem:[#allocation2 + $0x30] sm:$0xff]
    %v97 = vld [vmem:[#allocation2 + $0x38] sm:$0xff]
    %v98 = vld [vmem:[#allocation2 + $0x40] sm:$0xff]
    %v99 = vld [vmem:[#allocation2 + $0x48] sm:$0xff]
    %v100 = vld [vmem:[#allocation2 + $0x50] sm:$0xff]
    %v101 = vld [vmem:[#allocation2 + $0x58] sm:$0xff]
    %v102 = vld [vmem:[#allocation2 + $0x60] sm:$0xff]
    %v103 = vld [vmem:[#allocation2 + $0x68] sm:$0xff]
    %v104 = vld [vmem:[#allocation2 + $0x70] sm:$0xff]
    %v105 = vld [vmem:[#allocation2 + $0x78] sm:$0xff]
    %v106 = vld [vmem:[#allocation2 + $0x80] sm:$0xff]
    %v107 = vld [vmem:[#allocation2 + $0x88] sm:$0xff]
    %v108 = vld [vmem:[#allocation2 + $0x90] sm:$0xff]
    %v109 = vld [vmem:[#allocation2 + $0x98] sm:$0xff]
    %v110 = vld [vmem:[#allocation2 + $0xa0] sm:$0xff]
    %v111 = vld [vmem:[#allocation2 + $0xa8] sm:$0xff]
    %v112 = vld [vmem:[#allocation2 + $0xb0] sm:$0xff]
    %v113 = vld [vmem:[#allocation2 + $0xb8] sm:$0xff]
    %v114 = vld [vmem:[#allocation2 + $0xc0] sm:$0xff]
    %v115 = vld [vmem:[#allocation2 + $0xc8] sm:$0xff]
    %v116 = vld [vmem:[#allocation2 + $0xd0] sm:$0xff]
    %v117 = vld [vmem:[#allocation2 + $0xd8] sm:$0xff]
    %v118 = vld [vmem:[#allocation2 + $0xe0] sm:$0xff]
    %v119 = vld [vmem:[#allocation2 + $0xe8] sm:$0xff]
    %v120 = vld [vmem:[#allocation2 + $0xf0] sm:$0xff]
    %v121 = vld [vmem:[#allocation2 + $0xf8] sm:$0xff]
    %v122 = vld [vmem:[#allocation5] sm:$0xff]
    %v123 = vld [vmem:[#allocation5 + $0x8] sm:$0xff]
    %v124 = vld [vmem:[#allocation5 + $0x10] sm:$0xff]
    %v125 = vld [vmem:[#allocation5 + $0x18] sm:$0xff]
    %v126 = vld [vmem:[#allocation5 + $0x20] sm:$0xff]
    %v127 = vld [vmem:[#allocation5 + $0x28] sm:$0xff]
    %v128 = vld [vmem:[#allocation5 + $0x30] sm:$0xff]
    %v129 = vld [vmem:[#allocation5 + $0x38] sm:$0xff]
    %v130 = vld [vmem:[#allocation5 + $0x40] sm:$0xff]
    %v131 = vld [vmem:[#allocation5 + $0x48] sm:$0xff]
    %v132 = vld [vmem:[#allocation5 + $0x50] sm:$0xff]
    %v133 = vld [vmem:[#allocation5 + $0x58] sm:$0xff]
    %v134 = vld [vmem:[#allocation5 + $0x60] sm:$0xff]
    %v135 = vld [vmem:[#allocation5 + $0x68] sm:$0xff]
    %v136 = vld [vmem:[#allocation5 + $0x70] sm:$0xff]
    %v137 = vld [vmem:[#allocation5 + $0x78] sm:$0xff]
    %v138 = vld [vmem:[#allocation5 + $0x80] sm:$0xff]
    %v139 = vld [vmem:[#allocation5 + $0x88] sm:$0xff]
    %v140 = vld [vmem:[#allocation5 + $0x90] sm:$0xff]
    %v141 = vld [vmem:[#allocation5 + $0x98] sm:$0xff]
    %v142 = vld [vmem:[#allocation5 + $0xa0] sm:$0xff]
    %v143 = vld [vmem:[#allocation5 + $0xa8] sm:$0xff]
    %v144 = vld [vmem:[#allocation5 + $0xb0] sm:$0xff]
    %v145 = vld [vmem:[#allocation5 + $0xb8] sm:$0xff]
    %v146 = vld [vmem:[#allocation5 + $0xc0] sm:$0xff]
    %v147 = vld [vmem:[#allocation5 + $0xc8] sm:$0xff]
    %v148 = vld [vmem:[#allocation5 + $0xd0] sm:$0xff]
    %v149 = vld [vmem:[#allocation5 + $0xd8] sm:$0xff]
    %v150 = vld [vmem:[#allocation5 + $0xe0] sm:$0xff]
    %v151 = vld [vmem:[#allocation5 + $0xe8] sm:$0xff]
    %v152 = vld [vmem:[#allocation5 + $0xf0] sm:$0xff]
    %v153 = vld [vmem:[#allocation5 + $0xf8] sm:$0xff]
    %v154 = vld [vmem:[#allocation8] sm:$0xf]
    %v155 = vld [vmem:[#allocation8 + $0x4] sm:$0xf]
    %v156 = vld [vmem:[#allocation8 + $0x8] sm:$0xf]
    %v157 = vld [vmem:[#allocation8 + $0xc] sm:$0xf]
    %v158 = vld [vmem:[#allocation8 + $0x10] sm:$0xf]
    %v159 = vld [vmem:[#allocation8 + $0x14] sm:$0xf]
    %v160 = vld [vmem:[#allocation8 + $0x18] sm:$0xf]
    %v161 = vld [vmem:[#allocation8 + $0x1c] sm:$0xf]
    %v162 = vld [vmem:[#allocation8 + $0x20] sm:$0xf]
    %v163 = vld [vmem:[#allocation8 + $0x24] sm:$0xf]
    %v164 = vld [vmem:[#allocation8 + $0x28] sm:$0xf]
    %v165 = vld [vmem:[#allocation8 + $0x2c] sm:$0xf]
    %v166 = vld [vmem:[#allocation8 + $0x30] sm:$0xf]
    %v167 = vld [vmem:[#allocation8 + $0x34] sm:$0xf]
    %v168 = vld [vmem:[#allocation8 + $0x38] sm:$0xf]
    %v169 = vld [vmem:[#allocation8 + $0x3c] sm:$0xf]
    %v170 = vld [vmem:[#allocation10] sm:$0xf]
    %v171 = vld [vmem:[#allocation10 + $0x4] sm:$0xf]
    %v172 = vld [vmem:[#allocation10 + $0x8] sm:$0xf]
    %v173 = vld [vmem:[#allocation10 + $0xc] sm:$0xf]
    %v174 = vld [vmem:[#allocation10 + $0x10] sm:$0xf]
    %v175 = vld [vmem:[#allocation10 + $0x14] sm:$0xf]
    %v176 = vld [vmem:[#allocation10 + $0x18] sm:$0xf]
    %v177 = vld [vmem:[#allocation10 + $0x1c] sm:$0xf]
    %v178 = vld [vmem:[#allocation10 + $0x20] sm:$0xf]
    %v179 = vld [vmem:[#allocation10 + $0x24] sm:$0xf]
    %v180 = vld [vmem:[#allocation10 + $0x28] sm:$0xf]
    %v181 = vld [vmem:[#allocation10 + $0x2c] sm:$0xf]
    %v182 = vld [vmem:[#allocation10 + $0x30] sm:$0xf]
    %v183 = vld [vmem:[#allocation10 + $0x34] sm:$0xf]
    %v184 = vld [vmem:[#allocation10 + $0x38] sm:$0xf]
    %v185 = vld [vmem:[#allocation10 + $0x3c] sm:$0xf]
    %v186 = vld [vmem:[#allocation7] sm:$0xff]
    %v187 = vld [vmem:[#allocation7 + $0x8] sm:$0xff]
    %v188 = vld [vmem:[#allocation7 + $0x10] sm:$0xff]
    %v189 = vld [vmem:[#allocation7 + $0x18] sm:$0xff]
    %v190 = vld [vmem:[#allocation7 + $0x20] sm:$0xff]
    %v191 = vld [vmem:[#allocation7 + $0x28] sm:$0xff]
    %v192 = vld [vmem:[#allocation7 + $0x30] sm:$0xff]
    %v193 = vld [vmem:[#allocation7 + $0x38] sm:$0xff]
    %v194 = vld [vmem:[#allocation7 + $0x40] sm:$0xff]
    %v195 = vld [vmem:[#allocation7 + $0x48] sm:$0xff]
    %v196 = vld [vmem:[#allocation7 + $0x50] sm:$0xff]
    %v197 = vld [vmem:[#allocation7 + $0x58] sm:$0xff]
    %v198 = vld [vmem:[#allocation7 + $0x60] sm:$0xff]
    %v199 = vld [vmem:[#allocation7 + $0x68] sm:$0xff]
    %v200 = vld [vmem:[#allocation7 + $0x70] sm:$0xff]
    %v201 = vld [vmem:[#allocation7 + $0x78] sm:$0xff]
    %v202 = vld [vmem:[#allocation7 + $0x80] sm:$0xff]
    %v203 = vld [vmem:[#allocation7 + $0x88] sm:$0xff]
    %v204 = vld [vmem:[#allocation7 + $0x90] sm:$0xff]
    %v205 = vld [vmem:[#allocation7 + $0x98] sm:$0xff]
    %v206 = vld [vmem:[#allocation7 + $0xa0] sm:$0xff]
    %v207 = vld [vmem:[#allocation7 + $0xa8] sm:$0xff]
    %v208 = vld [vmem:[#allocation7 + $0xb0] sm:$0xff]
    %v209 = vld [vmem:[#allocation7 + $0xb8] sm:$0xff]
    %v210 = vld [vmem:[#allocation7 + $0xc0] sm:$0xff]
    %v211 = vld [vmem:[#allocation7 + $0xc8] sm:$0xff]
    %v212 = vld [vmem:[#allocation7 + $0xd0] sm:$0xff]
    %v213 = vld [vmem:[#allocation7 + $0xd8] sm:$0xff]
    %v214 = vld [vmem:[#allocation7 + $0xe0] sm:$0xff]
    %v215 = vld [vmem:[#allocation7 + $0xe8] sm:$0xff]
    %v216 = vld [vmem:[#allocation7 + $0xf0] sm:$0xff]
    %v217 = vld [vmem:[#allocation7 + $0xf8] sm:$0xff]
    %v218 = vmul.f32 %v186, 1e-05
    %v219 = vmul.f32 %v187, 1e-05
    %v220 = vmul.f32 %v188, 1e-05
    %v221 = vmul.f32 %v189, 1e-05
    %v222 = vmul.f32 %v190, 1e-05
    %v223 = vmul.f32 %v191, 1e-05
    %v224 = vmul.f32 %v192, 1e-05
    %v225 = vmul.f32 %v193, 1e-05
    %v226 = vmul.f32 %v194, 1e-05
    %v227 = vmul.f32 %v195, 1e-05
    %v228 = vmul.f32 %v196, 1e-05
    %v229 = vmul.f32 %v197, 1e-05
    %v230 = vmul.f32 %v198, 1e-05
    %v231 = vmul.f32 %v199, 1e-05
    %v232 = vmul.f32 %v200, 1e-05
    %v233 = vmul.f32 %v201, 1e-05
    %v234 = vmul.f32 %v202, 1e-05
    %v235 = vmul.f32 %v203, 1e-05
    %v236 = vmul.f32 %v204, 1e-05
    %v237 = vmul.f32 %v205, 1e-05
    %v238 = vmul.f32 %v206, 1e-05
    %v239 = vmul.f32 %v207, 1e-05
    %v240 = vmul.f32 %v208, 1e-05
    %v241 = vmul.f32 %v209, 1e-05
    %v242 = vmul.f32 %v210, 1e-05
    %v243 = vmul.f32 %v211, 1e-05
    %v244 = vmul.f32 %v212, 1e-05
    %v245 = vmul.f32 %v213, 1e-05
    %v246 = vmul.f32 %v214, 1e-05
    %v247 = vmul.f32 %v215, 1e-05
    %v248 = vmul.f32 %v216, 1e-05
    %v249 = vmul.f32 %v217, 1e-05
    %v250 = vadd.f32 %v90, %v218
    %v251 = vadd.f32 %v91, %v219
    %v252 = vadd.f32 %v92, %v220
    %v253 = vadd.f32 %v93, %v221
    %v254 = vadd.f32 %v94, %v222
    %v255 = vadd.f32 %v95, %v223
    %v256 = vadd.f32 %v96, %v224
    %v257 = vadd.f32 %v97, %v225
    %v258 = vadd.f32 %v98, %v226
    %v259 = vadd.f32 %v99, %v227
    %v260 = vadd.f32 %v100, %v228
    %v261 = vadd.f32 %v101, %v229
    %v262 = vadd.f32 %v102, %v230
    %v263 = vadd.f32 %v103, %v231
    %v264 = vadd.f32 %v104, %v232
    %v265 = vadd.f32 %v105, %v233
    %v266 = vadd.f32 %v106, %v234
    %v267 = vadd.f32 %v107, %v235
    %v268 = vadd.f32 %v108, %v236
    %v269 = vadd.f32 %v109, %v237
    %v270 = vadd.f32 %v110, %v238
    %v271 = vadd.f32 %v111, %v239
    %v272 = vadd.f32 %v112, %v240
    %v273 = vadd.f32 %v113, %v241
    %v274 = vadd.f32 %v114, %v242
    %v275 = vadd.f32 %v115, %v243
    %v276 = vadd.f32 %v116, %v244
    %v277 = vadd.f32 %v117, %v245
    %v278 = vadd.f32 %v118, %v246
    %v279 = vadd.f32 %v119, %v247
    %v280 = vadd.f32 %v120, %v248
    %v281 = vadd.f32 %v121, %v249
    %v282 = vpack.c.bf16 %v251, %v250
    %v283 = vpack.c.bf16 %v253, %v252
    %v284 = vpack.c.bf16 %v255, %v254
    %v285 = vpack.c.bf16 %v257, %v256
    %v286 = vpack.c.bf16 %v259, %v258
    %v287 = vpack.c.bf16 %v261, %v260
    %v288 = vpack.c.bf16 %v263, %v262
    %v289 = vpack.c.bf16 %v265, %v264
    %v290 = vpack.c.bf16 %v267, %v266
    %v291 = vpack.c.bf16 %v269, %v268
    %v292 = vpack.c.bf16 %v271, %v270
    %v293 = vpack.c.bf16 %v273, %v272
    %v294 = vpack.c.bf16 %v275, %v274
    %v295 = vpack.c.bf16 %v277, %v276
    %v296 = vpack.c.bf16 %v279, %v278
    %v297 = vpack.c.bf16 %v281, %v280
    %v314 = vunpack.c.l.b16 %v154
    %v315 = vunpack.c.l.b16 %v155
    %v316 = vunpack.c.l.b16 %v156
    %v317 = vunpack.c.l.b16 %v157
    %v318 = vunpack.c.l.b16 %v158
    %v319 = vunpack.c.l.b16 %v159
    %v320 = vunpack.c.l.b16 %v160
    %v321 = vunpack.c.l.b16 %v161
    %v322 = vunpack.c.l.b16 %v162
    %v323 = vunpack.c.l.b16 %v163
    %v324 = vunpack.c.l.b16 %v164
    %v325 = vunpack.c.l.b16 %v165
    %v326 = vunpack.c.l.b16 %v166
    %v327 = vunpack.c.l.b16 %v167
    %v328 = vunpack.c.l.b16 %v168
    %v329 = vunpack.c.l.b16 %v169
    %v330 = vpack.c.b16 %v315, %v314
    %v331 = vpack.c.b16 %v317, %v316
    %v332 = vpack.c.b16 %v319, %v318
    %v333 = vpack.c.b16 %v321, %v320
    %v334 = vpack.c.b16 %v323, %v322
    %v335 = vpack.c.b16 %v325, %v324
    %v336 = vpack.c.b16 %v327, %v326
    %v337 = vpack.c.b16 %v329, %v328
    %346 = vmatprep.subr.bf16.mxu0 0
    %347 = vmatpush1.bf16.msra.mxu0 %v330
    %348 = vmatprep.subr.bf16.mxu0 0
    %349 = vmatpush1.bf16.msra.mxu0 %v331
    %350 = vmatprep.subr.bf16.mxu0 0
    %351 = vmatpush1.bf16.msra.mxu0 %v332
    %352 = vmatprep.subr.bf16.mxu0 0
    %353 = vmatpush1.bf16.msra.mxu0 %v333
    %354 = vmatprep.subr.bf16.mxu0 0
    %355 = vmatpush1.bf16.msra.mxu0 %v334
    %356 = vmatprep.subr.bf16.mxu0 0
    %357 = vmatpush1.bf16.msra.mxu0 %v335
    %358 = vmatprep.subr.bf16.mxu0 0
    %359 = vmatpush1.bf16.msra.mxu0 %v336
    %360 = vmatprep.subr.bf16.mxu0 0
    %361 = vmatpush1.bf16.msra.mxu0 %v337
    %362 = vmatprep.subr.bf16.mxu0 0
    %363 = vmatpush1.bf16.msra.mxu0 0
    %364 = vmatprep.subr.bf16.mxu0 0
    %365 = vmatpush1.bf16.msra.mxu0 0
    %366 = vmatprep.subr.bf16.mxu0 0
    %367 = vmatpush1.bf16.msra.mxu0 0
    %368 = vmatprep.subr.bf16.mxu0 0
    %369 = vmatpush1.bf16.msra.mxu0 0
    %370 = vmatprep.subr.bf16.mxu0 0
    %371 = vmatpush1.bf16.msra.mxu0 0
    %372 = vmatprep.subr.bf16.mxu0 0
    %373 = vmatpush1.bf16.msra.mxu0 0
    %374 = vmatprep.subr.bf16.mxu0 0
    %375 = vmatpush1.bf16.msra.mxu0 0
    %376 = vmatprep.subr.bf16.mxu0 0
    %377 = vmatpush1.bf16.msra.mxu0 0
    %378 = vmatprep.mubr.bf16.mxu0 0
    %379 = vmatmul.mubr.bf16.gmra.mrb[0].mxu0 %v282
    %v380 = vpop.f32.mrb[0].mxu0
    %v381 = vadd.f32 0.0, %v380
    %v382 = vpop.f32.mrb[0].mxu0
    %v383 = vpop.f32.mrb[0].mxu0
    %v384 = vadd.f32 0.0, %v383
    %v385 = vpop.f32.mrb[0].mxu0
    %386 = vmatprep.mubr.bf16.mxu0 0
    %387 = vmatmul.mubr.bf16.gmra.mrb[0].mxu0 %v283
    %v388 = vpop.f32.mrb[0].mxu0
    %v389 = vadd.f32 0.0, %v388
    %v390 = vpop.f32.mrb[0].mxu0
    %v391 = vpop.f32.mrb[0].mxu0
    %v392 = vadd.f32 0.0, %v391
    %v393 = vpop.f32.mrb[0].mxu0
    %394 = vmatprep.mubr.bf16.mxu0 0
    %395 = vmatmul.mubr.bf16.gmra.mrb[0].mxu0 %v284
    %v396 = vpop.f32.mrb[0].mxu0
    %v397 = vadd.f32 0.0, %v396
    %v398 = vpop.f32.mrb[0].mxu0
    %v399 = vpop.f32.mrb[0].mxu0
    %v400 = vadd.f32 0.0, %v399
    %v401 = vpop.f32.mrb[0].mxu0
    %402 = vmatprep.mubr.bf16.mxu0 0
    %403 = vmatmul.mubr.bf16.gmra.mrb[0].mxu0 %v285
    %v404 = vpop.f32.mrb[0].mxu0
    %v405 = vadd.f32 0.0, %v404
    %v406 = vpop.f32.mrb[0].mxu0
    %v407 = vpop.f32.mrb[0].mxu0
    %v408 = vadd.f32 0.0, %v407
    %v409 = vpop.f32.mrb[0].mxu0
    %410 = vmatprep.mubr.bf16.mxu0 0
    %411 = vmatmul.mubr.bf16.gmra.mrb[0].mxu0 %v286
    %v412 = vpop.f32.mrb[0].mxu0
    %v413 = vadd.f32 0.0, %v412
    %v414 = vpop.f32.mrb[0].mxu0
    %v415 = vpop.f32.mrb[0].mxu0
    %v416 = vadd.f32 0.0, %v415
    %v417 = vpop.f32.mrb[0].mxu0
    %418 = vmatprep.mubr.bf16.mxu0 0
    %419 = vmatmul.mubr.bf16.gmra.mrb[0].mxu0 %v287
    %v420 = vpop.f32.mrb[0].mxu0
    %v421 = vadd.f32 0.0, %v420
    %v422 = vpop.f32.mrb[0].mxu0
    %v423 = vpop.f32.mrb[0].mxu0
    %v424 = vadd.f32 0.0, %v423
    %v425 = vpop.f32.mrb[0].mxu0
    %426 = vmatprep.mubr.bf16.mxu0 0
    %427 = vmatmul.mubr.bf16.gmra.mrb[0].mxu0 %v288
    %v428 = vpop.f32.mrb[0].mxu0
    %v429 = vadd.f32 0.0, %v428
    %v430 = vpop.f32.mrb[0].mxu0
    %v431 = vpop.f32.mrb[0].mxu0
    %v432 = vadd.f32 0.0, %v431
    %v433 = vpop.f32.mrb[0].mxu0
    %434 = vmatprep.mubr.bf16.mxu0 0
    %435 = vmatmul.mubr.bf16.gmra.mrb[0].mxu0 %v289
    %v436 = vpop.f32.mrb[0].mxu0
    %v437 = vadd.f32 0.0, %v436
    %v438 = vpop.f32.mrb[0].mxu0
    %v439 = vpop.f32.mrb[0].mxu0
    %v440 = vadd.f32 0.0, %v439
    %v441 = vpop.f32.mrb[0].mxu0
    %442 = vmatprep.mubr.bf16.mxu0 0
    %443 = vmatmul.mubr.bf16.gmra.mrb[0].mxu0 %v290
    %v444 = vpop.f32.mrb[0].mxu0
    %v445 = vadd.f32 0.0, %v444
    %v446 = vpop.f32.mrb[0].mxu0
    %v447 = vpop.f32.mrb[0].mxu0
    %v448 = vadd.f32 0.0, %v447
    %v449 = vpop.f32.mrb[0].mxu0
    %450 = vmatprep.mubr.bf16.mxu0 0
    %451 = vmatmul.mubr.bf16.gmra.mrb[0].mxu0 %v291
    %v452 = vpop.f32.mrb[0].mxu0
    %v453 = vadd.f32 0.0, %v452
    %v454 = vpop.f32.mrb[0].mxu0
    %v455 = vpop.f32.mrb[0].mxu0
    %v456 = vadd.f32 0.0, %v455
    %v457 = vpop.f32.mrb[0].mxu0
    %458 = vmatprep.mubr.bf16.mxu0 0
    %459 = vmatmul.mubr.bf16.gmra.mrb[0].mxu0 %v292
    %v460 = vpop.f32.mrb[0].mxu0
    %v461 = vadd.f32 0.0, %v460
    %v462 = vpop.f32.mrb[0].mxu0
    %v463 = vpop.f32.mrb[0].mxu0
    %v464 = vadd.f32 0.0, %v463
    %v465 = vpop.f32.mrb[0].mxu0
    %466 = vmatprep.mubr.bf16.mxu0 0
    %467 = vmatmul.mubr.bf16.gmra.mrb[0].mxu0 %v293
    %v468 = vpop.f32.mrb[0].mxu0
    %v469 = vadd.f32 0.0, %v468
    %v470 = vpop.f32.mrb[0].mxu0
    %v471 = vpop.f32.mrb[0].mxu0
    %v472 = vadd.f32 0.0, %v471
    %v473 = vpop.f32.mrb[0].mxu0
    %474 = vmatprep.mubr.bf16.mxu0 0
    %475 = vmatmul.mubr.bf16.gmra.mrb[0].mxu0 %v294
    %v476 = vpop.f32.mrb[0].mxu0
    %v477 = vadd.f32 0.0, %v476
    %v478 = vpop.f32.mrb[0].mxu0
    %v479 = vpop.f32.mrb[0].mxu0
    %v480 = vadd.f32 0.0, %v479
    %v481 = vpop.f32.mrb[0].mxu0
    %482 = vmatprep.mubr.bf16.mxu0 0
    %483 = vmatmul.mubr.bf16.gmra.mrb[0].mxu0 %v295
    %v484 = vpop.f32.mrb[0].mxu0
    %v485 = vadd.f32 0.0, %v484
    %v486 = vpop.f32.mrb[0].mxu0
    %v487 = vpop.f32.mrb[0].mxu0
    %v488 = vadd.f32 0.0, %v487
    %v489 = vpop.f32.mrb[0].mxu0
    %490 = vmatprep.mubr.bf16.mxu0 0
    %491 = vmatmul.mubr.bf16.gmra.mrb[0].mxu0 %v296
    %v492 = vpop.f32.mrb[0].mxu0
    %v493 = vadd.f32 0.0, %v492
    %v494 = vpop.f32.mrb[0].mxu0
    %v495 = vpop.f32.mrb[0].mxu0
    %v496 = vadd.f32 0.0, %v495
    %v497 = vpop.f32.mrb[0].mxu0
    %498 = vmatprep.mubr.bf16.mxu0 0
    %499 = vmatmul.mubr.bf16.gmra.mrb[0].mxu0 %v297
    %v500 = vpop.f32.mrb[0].mxu0
    %v501 = vadd.f32 0.0, %v500
    %v502 = vpop.f32.mrb[0].mxu0
    %v503 = vpop.f32.mrb[0].mxu0
    %v504 = vadd.f32 0.0, %v503
    %v505 = vpop.f32.mrb[0].mxu0
    %506 = vdwg.mxu0
    %v507 = vsub.f32 %v381, %v122
    %v508 = vsub.f32 %v384, %v123
    %v509 = vsub.f32 %v389, %v124
    %v510 = vsub.f32 %v392, %v125
    %v511 = vsub.f32 %v397, %v126
    %v512 = vsub.f32 %v400, %v127
    %v513 = vsub.f32 %v405, %v128
    %v514 = vsub.f32 %v408, %v129
    %v515 = vsub.f32 %v413, %v130
    %v516 = vsub.f32 %v416, %v131
    %v517 = vsub.f32 %v421, %v132
    %v518 = vsub.f32 %v424, %v133
    %v519 = vsub.f32 %v429, %v134
    %v520 = vsub.f32 %v432, %v135
    %v521 = vsub.f32 %v437, %v136
    %v522 = vsub.f32 %v440, %v137
    %v523 = vsub.f32 %v445, %v138
    %v524 = vsub.f32 %v448, %v139
    %v525 = vsub.f32 %v453, %v140
    %v526 = vsub.f32 %v456, %v141
    %v527 = vsub.f32 %v461, %v142
    %v528 = vsub.f32 %v464, %v143
    %v529 = vsub.f32 %v469, %v144
    %v530 = vsub.f32 %v472, %v145
    %v531 = vsub.f32 %v477, %v146
    %v532 = vsub.f32 %v480, %v147
    %v533 = vsub.f32 %v485, %v148
    %v534 = vsub.f32 %v488, %v149
    %v535 = vsub.f32 %v493, %v150
    %v536 = vsub.f32 %v496, %v151
    %v537 = vsub.f32 %v501, %v152
    %v538 = vsub.f32 %v504, %v153
    %v539 = vpack.c.bf16 %v508, %v507
    %v540 = vpack.c.bf16 %v510, %v509
    %v541 = vpack.c.bf16 %v512, %v511
    %v542 = vpack.c.bf16 %v514, %v513
    %v543 = vpack.c.bf16 %v516, %v515
    %v544 = vpack.c.bf16 %v518, %v517
    %v545 = vpack.c.bf16 %v520, %v519
    %v546 = vpack.c.bf16 %v522, %v521
    %v547 = vpack.c.bf16 %v524, %v523
    %v548 = vpack.c.bf16 %v526, %v525
    %v549 = vpack.c.bf16 %v528, %v527
    %v550 = vpack.c.bf16 %v530, %v529
    %v551 = vpack.c.bf16 %v532, %v531
    %v552 = vpack.c.bf16 %v534, %v533
    %v553 = vpack.c.bf16 %v536, %v535
    %v554 = vpack.c.bf16 %v538, %v537
    %v571 = vunpack.c.l.b16 %v170
    %v572 = vunpack.c.l.b16 %v171
    %v573 = vunpack.c.l.b16 %v172
    %v574 = vunpack.c.l.b16 %v173
    %v575 = vunpack.c.l.b16 %v174
    %v576 = vunpack.c.l.b16 %v175
    %v577 = vunpack.c.l.b16 %v176
    %v578 = vunpack.c.l.b16 %v177
    %v579 = vunpack.c.l.b16 %v178
    %v580 = vunpack.c.l.b16 %v179
    %v581 = vunpack.c.l.b16 %v180
    %v582 = vunpack.c.l.b16 %v181
    %v583 = vunpack.c.l.b16 %v182
    %v584 = vunpack.c.l.b16 %v183
    %v585 = vunpack.c.l.b16 %v184
    %v586 = vunpack.c.l.b16 %v185
    %v587 = vpack.c.b16 %v572, %v571
    %v588 = vpack.c.b16 %v574, %v573
    %v589 = vpack.c.b16 %v576, %v575
    %v590 = vpack.c.b16 %v578, %v577
    %v591 = vpack.c.b16 %v580, %v579
    %v592 = vpack.c.b16 %v582, %v581
    %v593 = vpack.c.b16 %v584, %v583
    %v594 = vpack.c.b16 %v586, %v585
    %603 = vmatprep.subr.bf16.mxu0 0
    %604 = vmatpush1.bf16.msra.mxu0 %v587
    %605 = vmatprep.subr.bf16.mxu0 0
    %606 = vmatpush1.bf16.msra.mxu0 %v588
    %607 = vmatprep.subr.bf16.mxu0 0
    %608 = vmatpush1.bf16.msra.mxu0 %v589
    %609 = vmatprep.subr.bf16.mxu0 0
    %610 = vmatpush1.bf16.msra.mxu0 %v590
    %611 = vmatprep.subr.bf16.mxu0 0
    %612 = vmatpush1.bf16.msra.mxu0 %v591
    %613 = vmatprep.subr.bf16.mxu0 0
    %614 = vmatpush1.bf16.msra.mxu0 %v592
    %615 = vmatprep.subr.bf16.mxu0 0
    %616 = vmatpush1.bf16.msra.mxu0 %v593
    %617 = vmatprep.subr.bf16.mxu0 0
    %618 = vmatpush1.bf16.msra.mxu0 %v594
    %619 = vmatprep.subr.bf16.mxu0 0
    %620 = vmatpush1.bf16.msra.mxu0 0
    %621 = vmatprep.subr.bf16.mxu0 0
    %622 = vmatpush1.bf16.msra.mxu0 0
    %623 = vmatprep.subr.bf16.mxu0 0
    %624 = vmatpush1.bf16.msra.mxu0 0
    %625 = vmatprep.subr.bf16.mxu0 0
    %626 = vmatpush1.bf16.msra.mxu0 0
    %627 = vmatprep.subr.bf16.mxu0 0
    %628 = vmatpush1.bf16.msra.mxu0 0
    %629 = vmatprep.subr.bf16.mxu0 0
    %630 = vmatpush1.bf16.msra.mxu0 0
    %631 = vmatprep.subr.bf16.mxu0 0
    %632 = vmatpush1.bf16.msra.mxu0 0
    %633 = vmatprep.subr.bf16.mxu0 0
    %634 = vmatpush1.bf16.msra.mxu0 0
    %635 = vmatprep.mubr.bf16.mxu0 0
    %636 = vmatmul.mubr.bf16.gmra.mrb[0].mxu0 %v539
    %v637 = vpop.f32.mrb[0].mxu0
    %v638 = vadd.f32 0.0, %v637
    %v639 = vpop.f32.mrb[0].mxu0
    %v640 = vpop.f32.mrb[0].mxu0
    %v641 = vadd.f32 0.0, %v640
    %v642 = vpop.f32.mrb[0].mxu0
    %643 = vmatprep.mubr.bf16.mxu0 0
    %644 = vmatmul.mubr.bf16.gmra.mrb[0].mxu0 %v540
    %v645 = vpop.f32.mrb[0].mxu0
    %v646 = vadd.f32 0.0, %v645
    %v647 = vpop.f32.mrb[0].mxu0
    %v648 = vpop.f32.mrb[0].mxu0
    %v649 = vadd.f32 0.0, %v648
    %v650 = vpop.f32.mrb[0].mxu0
    %651 = vmatprep.mubr.bf16.mxu0 0
    %652 = vmatmul.mubr.bf16.gmra.mrb[0].mxu0 %v541
    %v653 = vpop.f32.mrb[0].mxu0
    %v654 = vadd.f32 0.0, %v653
    %v655 = vpop.f32.mrb[0].mxu0
    %v656 = vpop.f32.mrb[0].mxu0
    %v657 = vadd.f32 0.0, %v656
    %v658 = vpop.f32.mrb[0].mxu0
    %659 = vmatprep.mubr.bf16.mxu0 0
    %660 = vmatmul.mubr.bf16.gmra.mrb[0].mxu0 %v542
    %v661 = vpop.f32.mrb[0].mxu0
    %v662 = vadd.f32 0.0, %v661
    %v663 = vpop.f32.mrb[0].mxu0
    %v664 = vpop.f32.mrb[0].mxu0
    %v665 = vadd.f32 0.0, %v664
    %v666 = vpop.f32.mrb[0].mxu0
    %667 = vmatprep.mubr.bf16.mxu0 0
    %668 = vmatmul.mubr.bf16.gmra.mrb[0].mxu0 %v543
    %v669 = vpop.f32.mrb[0].mxu0
    %v670 = vadd.f32 0.0, %v669
    %v671 = vpop.f32.mrb[0].mxu0
    %v672 = vpop.f32.mrb[0].mxu0
    %v673 = vadd.f32 0.0, %v672
    %v674 = vpop.f32.mrb[0].mxu0
    %675 = vmatprep.mubr.bf16.mxu0 0
    %676 = vmatmul.mubr.bf16.gmra.mrb[0].mxu0 %v544
    %v677 = vpop.f32.mrb[0].mxu0
    %v678 = vadd.f32 0.0, %v677
    %v679 = vpop.f32.mrb[0].mxu0
    %v680 = vpop.f32.mrb[0].mxu0
    %v681 = vadd.f32 0.0, %v680
    %v682 = vpop.f32.mrb[0].mxu0
    %683 = vmatprep.mubr.bf16.mxu0 0
    %684 = vmatmul.mubr.bf16.gmra.mrb[0].mxu0 %v545
    %v685 = vpop.f32.mrb[0].mxu0
    %v686 = vadd.f32 0.0, %v685
    %v687 = vpop.f32.mrb[0].mxu0
    %v688 = vpop.f32.mrb[0].mxu0
    %v689 = vadd.f32 0.0, %v688
    %v690 = vpop.f32.mrb[0].mxu0
    %691 = vmatprep.mubr.bf16.mxu0 0
    %692 = vmatmul.mubr.bf16.gmra.mrb[0].mxu0 %v546
    %v693 = vpop.f32.mrb[0].mxu0
    %v694 = vadd.f32 0.0, %v693
    %v695 = vpop.f32.mrb[0].mxu0
    %v696 = vpop.f32.mrb[0].mxu0
    %v697 = vadd.f32 0.0, %v696
    %v698 = vpop.f32.mrb[0].mxu0
    %699 = vmatprep.mubr.bf16.mxu0 0
    %700 = vmatmul.mubr.bf16.gmra.mrb[0].mxu0 %v547
    %v701 = vpop.f32.mrb[0].mxu0
    %v702 = vadd.f32 0.0, %v701
    %v703 = vpop.f32.mrb[0].mxu0
    %v704 = vpop.f32.mrb[0].mxu0
    %v705 = vadd.f32 0.0, %v704
    %v706 = vpop.f32.mrb[0].mxu0
    %707 = vmatprep.mubr.bf16.mxu0 0
    %708 = vmatmul.mubr.bf16.gmra.mrb[0].mxu0 %v548
    %v709 = vpop.f32.mrb[0].mxu0
    %v710 = vadd.f32 0.0, %v709
    %v711 = vpop.f32.mrb[0].mxu0
    %v712 = vpop.f32.mrb[0].mxu0
    %v713 = vadd.f32 0.0, %v712
    %v714 = vpop.f32.mrb[0].mxu0
    %715 = vmatprep.mubr.bf16.mxu0 0
    %716 = vmatmul.mubr.bf16.gmra.mrb[0].mxu0 %v549
    %v717 = vpop.f32.mrb[0].mxu0
    %v718 = vadd.f32 0.0, %v717
    %v719 = vpop.f32.mrb[0].mxu0
    %v720 = vpop.f32.mrb[0].mxu0
    %v721 = vadd.f32 0.0, %v720
    %v722 = vpop.f32.mrb[0].mxu0
    %723 = vmatprep.mubr.bf16.mxu0 0
    %724 = vmatmul.mubr.bf16.gmra.mrb[0].mxu0 %v550
    %v725 = vpop.f32.mrb[0].mxu0
    %v726 = vadd.f32 0.0, %v725
    %v727 = vpop.f32.mrb[0].mxu0
    %v728 = vpop.f32.mrb[0].mxu0
    %v729 = vadd.f32 0.0, %v728
    %v730 = vpop.f32.mrb[0].mxu0
    %731 = vmatprep.mubr.bf16.mxu0 0
    %732 = vmatmul.mubr.bf16.gmra.mrb[0].mxu0 %v551
    %v733 = vpop.f32.mrb[0].mxu0
    %v734 = vadd.f32 0.0, %v733
    %v735 = vpop.f32.mrb[0].mxu0
    %v736 = vpop.f32.mrb[0].mxu0
    %v737 = vadd.f32 0.0, %v736
    %v738 = vpop.f32.mrb[0].mxu0
    %739 = vmatprep.mubr.bf16.mxu0 0
    %740 = vmatmul.mubr.bf16.gmra.mrb[0].mxu0 %v552
    %v741 = vpop.f32.mrb[0].mxu0
    %v742 = vadd.f32 0.0, %v741
    %v743 = vpop.f32.mrb[0].mxu0
    %v744 = vpop.f32.mrb[0].mxu0
    %v745 = vadd.f32 0.0, %v744
    %v746 = vpop.f32.mrb[0].mxu0
    %747 = vmatprep.mubr.bf16.mxu0 0
    %748 = vmatmul.mubr.bf16.gmra.mrb[0].mxu0 %v553
    %v749 = vpop.f32.mrb[0].mxu0
    %v750 = vadd.f32 0.0, %v749
    %v751 = vpop.f32.mrb[0].mxu0
    %v752 = vpop.f32.mrb[0].mxu0
    %v753 = vadd.f32 0.0, %v752
    %v754 = vpop.f32.mrb[0].mxu0
    %755 = vmatprep.mubr.bf16.mxu0 0
    %756 = vmatmul.mubr.bf16.gmra.mrb[0].mxu0 %v554
    %v757 = vpop.f32.mrb[0].mxu0
    %v758 = vadd.f32 0.0, %v757
    %v759 = vpop.f32.mrb[0].mxu0
    %v760 = vpop.f32.mrb[0].mxu0
    %v761 = vadd.f32 0.0, %v760
    %v762 = vpop.f32.mrb[0].mxu0
    %763 = vdwg.mxu0
    %v764 = vmul.f32 %v638, 6.103516e-08
    %v765 = vmul.f32 %v641, 6.103516e-08
    %v766 = vmul.f32 %v646, 6.103516e-08
    %v767 = vmul.f32 %v649, 6.103516e-08
    %v768 = vmul.f32 %v654, 6.103516e-08
    %v769 = vmul.f32 %v657, 6.103516e-08
    %v770 = vmul.f32 %v662, 6.103516e-08
    %v771 = vmul.f32 %v665, 6.103516e-08
    %v772 = vmul.f32 %v670, 6.103516e-08
    %v773 = vmul.f32 %v673, 6.103516e-08
    %v774 = vmul.f32 %v678, 6.103516e-08
    %v775 = vmul.f32 %v681, 6.103516e-08
    %v776 = vmul.f32 %v686, 6.103516e-08
    %v777 = vmul.f32 %v689, 6.103516e-08
    %v778 = vmul.f32 %v694, 6.103516e-08
    %v779 = vmul.f32 %v697, 6.103516e-08
    %v780 = vmul.f32 %v702, 6.103516e-08
    %v781 = vmul.f32 %v705, 6.103516e-08
    %v782 = vmul.f32 %v710, 6.103516e-08
    %v783 = vmul.f32 %v713, 6.103516e-08
    %v784 = vmul.f32 %v718, 6.103516e-08
    %v785 = vmul.f32 %v721, 6.103516e-08
    %v786 = vmul.f32 %v726, 6.103516e-08
    %v787 = vmul.f32 %v729, 6.103516e-08
    %v788 = vmul.f32 %v734, 6.103516e-08
    %v789 = vmul.f32 %v737, 6.103516e-08
    %v790 = vmul.f32 %v742, 6.103516e-08
    %v791 = vmul.f32 %v745, 6.103516e-08
    %v792 = vmul.f32 %v750, 6.103516e-08
    %v793 = vmul.f32 %v753, 6.103516e-08
    %v794 = vmul.f32 %v758, 6.103516e-08
    %v795 = vmul.f32 %v761, 6.103516e-08
    %v796 = vadd.f32 %v218, %v764
    %v797 = vadd.f32 %v219, %v765
    %v798 = vadd.f32 %v220, %v766
    %v799 = vadd.f32 %v221, %v767
    %v800 = vadd.f32 %v222, %v768
    %v801 = vadd.f32 %v223, %v769
    %v802 = vadd.f32 %v224, %v770
    %v803 = vadd.f32 %v225, %v771
    %v804 = vadd.f32 %v226, %v772
    %v805 = vadd.f32 %v227, %v773
    %v806 = vadd.f32 %v228, %v774
    %v807 = vadd.f32 %v229, %v775
    %v808 = vadd.f32 %v230, %v776
    %v809 = vadd.f32 %v231, %v777
    %v810 = vadd.f32 %v232, %v778
    %v811 = vadd.f32 %v233, %v779
    %v812 = vadd.f32 %v234, %v780
    %v813 = vadd.f32 %v235, %v781
    %v814 = vadd.f32 %v236, %v782
    %v815 = vadd.f32 %v237, %v783
    %v816 = vadd.f32 %v238, %v784
    %v817 = vadd.f32 %v239, %v785
    %v818 = vadd.f32 %v240, %v786
    %v819 = vadd.f32 %v241, %v787
    %v820 = vadd.f32 %v242, %v788
    %v821 = vadd.f32 %v243, %v789
    %v822 = vadd.f32 %v244, %v790
    %v823 = vadd.f32 %v245, %v791
    %v824 = vadd.f32 %v246, %v792
    %v825 = vadd.f32 %v247, %v793
    %v826 = vadd.f32 %v248, %v794
    %v827 = vadd.f32 %v249, %v795
    %v828 = vand.u32 2147483647, %v796
    %v829 = vand.u32 2147483647, %v797
    %v830 = vand.u32 2147483647, %v798
    %v831 = vand.u32 2147483647, %v799
    %v832 = vand.u32 2147483647, %v800
    %v833 = vand.u32 2147483647, %v801
    %v834 = vand.u32 2147483647, %v802
    %v835 = vand.u32 2147483647, %v803
    %v836 = vand.u32 2147483647, %v804
    %v837 = vand.u32 2147483647, %v805
    %v838 = vand.u32 2147483647, %v806
    %v839 = vand.u32 2147483647, %v807
    %v840 = vand.u32 2147483647, %v808
    %v841 = vand.u32 2147483647, %v809
    %v842 = vand.u32 2147483647, %v810
    %v843 = vand.u32 2147483647, %v811
    %v844 = vand.u32 2147483647, %v812
    %v845 = vand.u32 2147483647, %v813
    %v846 = vand.u32 2147483647, %v814
    %v847 = vand.u32 2147483647, %v815
    %v848 = vand.u32 2147483647, %v816
    %v849 = vand.u32 2147483647, %v817
    %v850 = vand.u32 2147483647, %v818
    %v851 = vand.u32 2147483647, %v819
    %v852 = vand.u32 2147483647, %v820
    %v853 = vand.u32 2147483647, %v821
    %v854 = vand.u32 2147483647, %v822
    %v855 = vand.u32 2147483647, %v823
    %v856 = vand.u32 2147483647, %v824
    %v857 = vand.u32 2147483647, %v825
    %v858 = vand.u32 2147483647, %v826
    %v859 = vand.u32 2147483647, %v827
    %860 = vmax.xlane.f32.xlu0 %v828
    %v861 = vpop.xlane.xlu0 %860
    %862 = vmax.xlane.f32.xlu0 %v829
    %v863 = vpop.xlane.xlu0 %862
    %864 = vmax.xlane.f32.xlu0 %v830
    %v865 = vpop.xlane.xlu0 %864
    %866 = vmax.xlane.f32.xlu0 %v831
    %v867 = vpop.xlane.xlu0 %866
    %868 = vmax.xlane.f32.xlu0 %v832
    %v869 = vpop.xlane.xlu0 %868
    %870 = vmax.xlane.f32.xlu0 %v833
    %v871 = vpop.xlane.xlu0 %870
    %872 = vmax.xlane.f32.xlu0 %v834
    %v873 = vpop.xlane.xlu0 %872
    %874 = vmax.xlane.f32.xlu0 %v835
    %v875 = vpop.xlane.xlu0 %874
    %876 = vmax.xlane.f32.xlu0 %v836
    %v877 = vpop.xlane.xlu0 %876
    %878 = vmax.xlane.f32.xlu0 %v837
    %v879 = vpop.xlane.xlu0 %878
    %880 = vmax.xlane.f32.xlu0 %v838
    %v881 = vpop.xlane.xlu0 %880
    %882 = vmax.xlane.f32.xlu0 %v839
    %v883 = vpop.xlane.xlu0 %882
    %884 = vmax.xlane.f32.xlu0 %v840
    %v885 = vpop.xlane.xlu0 %884
    %886 = vmax.xlane.f32.xlu0 %v841
    %v887 = vpop.xlane.xlu0 %886
    %888 = vmax.xlane.f32.xlu0 %v842
    %v889 = vpop.xlane.xlu0 %888
    %890 = vmax.xlane.f32.xlu0 %v843
    %v891 = vpop.xlane.xlu0 %890
    %892 = vmax.xlane.f32.xlu0 %v844
    %v893 = vpop.xlane.xlu0 %892
    %894 = vmax.xlane.f32.xlu0 %v845
    %v895 = vpop.xlane.xlu0 %894
    %896 = vmax.xlane.f32.xlu0 %v846
    %v897 = vpop.xlane.xlu0 %896
    %898 = vmax.xlane.f32.xlu0 %v847
    %v899 = vpop.xlane.xlu0 %898
    %900 = vmax.xlane.f32.xlu0 %v848
    %v901 = vpop.xlane.xlu0 %900
    %902 = vmax.xlane.f32.xlu0 %v849
    %v903 = vpop.xlane.xlu0 %902
    %904 = vmax.xlane.f32.xlu0 %v850
    %v905 = vpop.xlane.xlu0 %904
    %906 = vmax.xlane.f32.xlu0 %v851
    %v907 = vpop.xlane.xlu0 %906
    %908 = vmax.xlane.f32.xlu0 %v852
    %v909 = vpop.xlane.xlu0 %908
    %910 = vmax.xlane.f32.xlu0 %v853
    %v911 = vpop.xlane.xlu0 %910
    %912 = vmax.xlane.f32.xlu0 %v854
    %v913 = vpop.xlane.xlu0 %912
    %914 = vmax.xlane.f32.xlu0 %v855
    %v915 = vpop.xlane.xlu0 %914
    %916 = vmax.xlane.f32.xlu0 %v856
    %v917 = vpop.xlane.xlu0 %916
    %918 = vmax.xlane.f32.xlu0 %v857
    %v919 = vpop.xlane.xlu0 %918
    %920 = vmax.xlane.f32.xlu0 %v858
    %v921 = vpop.xlane.xlu0 %920
    %922 = vmax.xlane.f32.xlu0 %v859
    %v923 = vpop.xlane.xlu0 %922
    %v924 = vadd.f32 %v861, 1e-06
    %v925 = vadd.f32 %v863, 1e-06
    %v926 = vadd.f32 %v865, 1e-06
    %v927 = vadd.f32 %v867, 1e-06
    %v928 = vadd.f32 %v869, 1e-06
    %v929 = vadd.f32 %v871, 1e-06
    %v930 = vadd.f32 %v873, 1e-06
    %v931 = vadd.f32 %v875, 1e-06
    %v932 = vadd.f32 %v877, 1e-06
    %v933 = vadd.f32 %v879, 1e-06
    %v934 = vadd.f32 %v881, 1e-06
    %v935 = vadd.f32 %v883, 1e-06
    %v936 = vadd.f32 %v885, 1e-06
    %v937 = vadd.f32 %v887, 1e-06
    %v938 = vadd.f32 %v889, 1e-06
    %v939 = vadd.f32 %v891, 1e-06
    %v940 = vadd.f32 %v893, 1e-06
    %v941 = vadd.f32 %v895, 1e-06
    %v942 = vadd.f32 %v897, 1e-06
    %v943 = vadd.f32 %v899, 1e-06
    %v944 = vadd.f32 %v901, 1e-06
    %v945 = vadd.f32 %v903, 1e-06
    %v946 = vadd.f32 %v905, 1e-06
    %v947 = vadd.f32 %v907, 1e-06
    %v948 = vadd.f32 %v909, 1e-06
    %v949 = vadd.f32 %v911, 1e-06
    %v950 = vadd.f32 %v913, 1e-06
    %v951 = vadd.f32 %v915, 1e-06
    %v952 = vadd.f32 %v917, 1e-06
    %v953 = vadd.f32 %v919, 1e-06
    %v954 = vadd.f32 %v921, 1e-06
    %v955 = vadd.f32 %v923, 1e-06
    %v956 = vrcp.pop %v924
    %v957 = vrcp.pop %v925
    %v958 = vrcp.pop %v926
    %v959 = vrcp.pop %v927
    %v960 = vrcp.pop %v928
    %v961 = vrcp.pop %v929
    %v962 = vrcp.pop %v930
    %v963 = vrcp.pop %v931
    %v964 = vrcp.pop %v932
    %v965 = vrcp.pop %v933
    %v966 = vrcp.pop %v934
    %v967 = vrcp.pop %v935
    %v968 = vrcp.pop %v936
    %v969 = vrcp.pop %v937
    %v970 = vrcp.pop %v938
    %v971 = vrcp.pop %v939
    %v972 = vrcp.pop %v940
    %v973 = vrcp.pop %v941
    %v974 = vrcp.pop %v942
    %v975 = vrcp.pop %v943
    %v976 = vrcp.pop %v944
    %v977 = vrcp.pop %v945
    %v978 = vrcp.pop %v946
    %v979 = vrcp.pop %v947
    %v980 = vrcp.pop %v948
    %v981 = vrcp.pop %v949
    %v982 = vrcp.pop %v950
    %v983 = vrcp.pop %v951
    %v984 = vrcp.pop %v952
    %v985 = vrcp.pop %v953
    %v986 = vrcp.pop %v954
    %v987 = vrcp.pop %v955
    %v988 = vmul.f32 %v796, %v956
    %v989 = vmul.f32 %v797, %v957
    %v990 = vmul.f32 %v798, %v958
    %v991 = vmul.f32 %v799, %v959
    %v992 = vmul.f32 %v800, %v960
    %v993 = vmul.f32 %v801, %v961
    %v994 = vmul.f32 %v802, %v962
    %v995 = vmul.f32 %v803, %v963
    %v996 = vmul.f32 %v804, %v964
    %v997 = vmul.f32 %v805, %v965
    %v998 = vmul.f32 %v806, %v966
    %v999 = vmul.f32 %v807, %v967
    %v1000 = vmul.f32 %v808, %v968
    %v1001 = vmul.f32 %v809, %v969
    %v1002 = vmul.f32 %v810, %v970
    %v1003 = vmul.f32 %v811, %v971
    %v1004 = vmul.f32 %v812, %v972
    %v1005 = vmul.f32 %v813, %v973
    %v1006 = vmul.f32 %v814, %v974
    %v1007 = vmul.f32 %v815, %v975
    %v1008 = vmul.f32 %v816, %v976
    %v1009 = vmul.f32 %v817, %v977
    %v1010 = vmul.f32 %v818, %v978
    %v1011 = vmul.f32 %v819, %v979
    %v1012 = vmul.f32 %v820, %v980
    %v1013 = vmul.f32 %v821, %v981
    %v1014 = vmul.f32 %v822, %v982
    %v1015 = vmul.f32 %v823, %v983
    %v1016 = vmul.f32 %v824, %v984
    %v1017 = vmul.f32 %v825, %v985
    %v1018 = vmul.f32 %v826, %v986
    %v1019 = vmul.f32 %v827, %v987
    %v1020 = vadd.f32 %v90, %v988
    %v1021 = vadd.f32 %v91, %v989
    %v1022 = vadd.f32 %v92, %v990
    %v1023 = vadd.f32 %v93, %v991
    %v1024 = vadd.f32 %v94, %v992
    %v1025 = vadd.f32 %v95, %v993
    %v1026 = vadd.f32 %v96, %v994
    %v1027 = vadd.f32 %v97, %v995
    %v1028 = vadd.f32 %v98, %v996
    %v1029 = vadd.f32 %v99, %v997
    %v1030 = vadd.f32 %v100, %v998
    %v1031 = vadd.f32 %v101, %v999
    %v1032 = vadd.f32 %v102, %v1000
    %v1033 = vadd.f32 %v103, %v1001
    %v1034 = vadd.f32 %v104, %v1002
    %v1035 = vadd.f32 %v105, %v1003
    %v1036 = vadd.f32 %v106, %v1004
    %v1037 = vadd.f32 %v107, %v1005
    %v1038 = vadd.f32 %v108, %v1006
    %v1039 = vadd.f32 %v109, %v1007
    %v1040 = vadd.f32 %v110, %v1008
    %v1041 = vadd.f32 %v111, %v1009
    %v1042 = vadd.f32 %v112, %v1010
    %v1043 = vadd.f32 %v113, %v1011
    %v1044 = vadd.f32 %v114, %v1012
    %v1045 = vadd.f32 %v115, %v1013
    %v1046 = vadd.f32 %v116, %v1014
    %v1047 = vadd.f32 %v117, %v1015
    %v1048 = vadd.f32 %v118, %v1016
    %v1049 = vadd.f32 %v119, %v1017
    %v1050 = vadd.f32 %v120, %v1018
    %v1051 = vadd.f32 %v121, %v1019
    %v1052 = vpack.c.bf16 %v1021, %v1020
    %v1053 = vpack.c.bf16 %v1023, %v1022
    %v1054 = vpack.c.bf16 %v1025, %v1024
    %v1055 = vpack.c.bf16 %v1027, %v1026
    %v1056 = vpack.c.bf16 %v1029, %v1028
    %v1057 = vpack.c.bf16 %v1031, %v1030
    %v1058 = vpack.c.bf16 %v1033, %v1032
    %v1059 = vpack.c.bf16 %v1035, %v1034
    %v1060 = vpack.c.bf16 %v1037, %v1036
    %v1061 = vpack.c.bf16 %v1039, %v1038
    %v1062 = vpack.c.bf16 %v1041, %v1040
    %v1063 = vpack.c.bf16 %v1043, %v1042
    %v1064 = vpack.c.bf16 %v1045, %v1044
    %v1065 = vpack.c.bf16 %v1047, %v1046
    %v1066 = vpack.c.bf16 %v1049, %v1048
    %v1067 = vpack.c.bf16 %v1051, %v1050
    %1068 = vmatprep.subr.bf16.mxu0 0
    %1069 = vmatpush1.bf16.msra.mxu0 %v330
    %1070 = vmatprep.subr.bf16.mxu0 0
    %1071 = vmatpush1.bf16.msra.mxu0 %v331
    %1072 = vmatprep.subr.bf16.mxu0 0
    %1073 = vmatpush1.bf16.msra.mxu0 %v332
    %1074 = vmatprep.subr.bf16.mxu0 0
    %1075 = vmatpush1.bf16.msra.mxu0 %v333
    %1076 = vmatprep.subr.bf16.mxu0 0
    %1077 = vmatpush1.bf16.msra.mxu0 %v334
    %1078 = vmatprep.subr.bf16.mxu0 0
    %1079 = vmatpush1.bf16.msra.mxu0 %v335
    %1080 = vmatprep.subr.bf16.mxu0 0
    %1081 = vmatpush1.bf16.msra.mxu0 %v336
    %1082 = vmatprep.subr.bf16.mxu0 0
    %1083 = vmatpush1.bf16.msra.mxu0 %v337
    %1084 = vmatprep.subr.bf16.mxu0 0
    %1085 = vmatpush1.bf16.msra.mxu0 0
    %1086 = vmatprep.subr.bf16.mxu0 0
    %1087 = vmatpush1.bf16.msra.mxu0 0
    %1088 = vmatprep.subr.bf16.mxu0 0
    %1089 = vmatpush1.bf16.msra.mxu0 0
    %1090 = vmatprep.subr.bf16.mxu0 0
    %1091 = vmatpush1.bf16.msra.mxu0 0
    %1092 = vmatprep.subr.bf16.mxu0 0
    %1093 = vmatpush1.bf16.msra.mxu0 0
    %1094 = vmatprep.subr.bf16.mxu0 0
    %1095 = vmatpush1.bf16.msra.mxu0 0
    %1096 = vmatprep.subr.bf16.mxu0 0
    %1097 = vmatpush1.bf16.msra.mxu0 0
    %1098 = vmatprep.subr.bf16.mxu0 0
    %1099 = vmatpush1.bf16.msra.mxu0 0
    %1100 = vmatprep.mubr.bf16.mxu0 0
    %1101 = vmatmul.mubr.bf16.gmra.mrb[0].mxu0 %v1052
    %v1102 = vpop.f32.mrb[0].mxu0
    %v1103 = vadd.f32 0.0, %v1102
    %v1104 = vpop.f32.mrb[0].mxu0
    %v1105 = vpop.f32.mrb[0].mxu0
    %v1106 = vadd.f32 0.0, %v1105
    %v1107 = vpop.f32.mrb[0].mxu0
    %1108 = vmatprep.mubr.bf16.mxu0 0
    %1109 = vmatmul.mubr.bf16.gmra.mrb[0].mxu0 %v1053
    %v1110 = vpop.f32.mrb[0].mxu0
    %v1111 = vadd.f32 0.0, %v1110
    %v1112 = vpop.f32.mrb[0].mxu0
    %v1113 = vpop.f32.mrb[0].mxu0
    %v1114 = vadd.f32 0.0, %v1113
    %v1115 = vpop.f32.mrb[0].mxu0
    %1116 = vmatprep.mubr.bf16.mxu0 0
    %1117 = vmatmul.mubr.bf16.gmra.mrb[0].mxu0 %v1054
    %v1118 = vpop.f32.mrb[0].mxu0
    %v1119 = vadd.f32 0.0, %v1118
    %v1120 = vpop.f32.mrb[0].mxu0
    %v1121 = vpop.f32.mrb[0].mxu0
    %v1122 = vadd.f32 0.0, %v1121
    %v1123 = vpop.f32.mrb[0].mxu0
    %1124 = vmatprep.mubr.bf16.mxu0 0
    %1125 = vmatmul.mubr.bf16.gmra.mrb[0].mxu0 %v1055
    %v1126 = vpop.f32.mrb[0].mxu0
    %v1127 = vadd.f32 0.0, %v1126
    %v1128 = vpop.f32.mrb[0].mxu0
    %v1129 = vpop.f32.mrb[0].mxu0
    %v1130 = vadd.f32 0.0, %v1129
    %v1131 = vpop.f32.mrb[0].mxu0
    %1132 = vmatprep.mubr.bf16.mxu0 0
    %1133 = vmatmul.mubr.bf16.gmra.mrb[0].mxu0 %v1056
    %v1134 = vpop.f32.mrb[0].mxu0
    %v1135 = vadd.f32 0.0, %v1134
    %v1136 = vpop.f32.mrb[0].mxu0
    %v1137 = vpop.f32.mrb[0].mxu0
    %v1138 = vadd.f32 0.0, %v1137
    %v1139 = vpop.f32.mrb[0].mxu0
    %1140 = vmatprep.mubr.bf16.mxu0 0
    %1141 = vmatmul.mubr.bf16.gmra.mrb[0].mxu0 %v1057
    %v1142 = vpop.f32.mrb[0].mxu0
    %v1143 = vadd.f32 0.0, %v1142
    %v1144 = vpop.f32.mrb[0].mxu0
    %v1145 = vpop.f32.mrb[0].mxu0
    %v1146 = vadd.f32 0.0, %v1145
    %v1147 = vpop.f32.mrb[0].mxu0
    %1148 = vmatprep.mubr.bf16.mxu0 0
    %1149 = vmatmul.mubr.bf16.gmra.mrb[0].mxu0 %v1058
    %v1150 = vpop.f32.mrb[0].mxu0
    %v1151 = vadd.f32 0.0, %v1150
    %v1152 = vpop.f32.mrb[0].mxu0
    %v1153 = vpop.f32.mrb[0].mxu0
    %v1154 = vadd.f32 0.0, %v1153
    %v1155 = vpop.f32.mrb[0].mxu0
    %1156 = vmatprep.mubr.bf16.mxu0 0
    %1157 = vmatmul.mubr.bf16.gmra.mrb[0].mxu0 %v1059
    %v1158 = vpop.f32.mrb[0].mxu0
    %v1159 = vadd.f32 0.0, %v1158
    %v1160 = vpop.f32.mrb[0].mxu0
    %v1161 = vpop.f32.mrb[0].mxu0
    %v1162 = vadd.f32 0.0, %v1161
    %v1163 = vpop.f32.mrb[0].mxu0
    %1164 = vmatprep.mubr.bf16.mxu0 0
    %1165 = vmatmul.mubr.bf16.gmra.mrb[0].mxu0 %v1060
    %v1166 = vpop.f32.mrb[0].mxu0
    %v1167 = vadd.f32 0.0, %v1166
    %v1168 = vpop.f32.mrb[0].mxu0
    %v1169 = vpop.f32.mrb[0].mxu0
    %v1170 = vadd.f32 0.0, %v1169
    %v1171 = vpop.f32.mrb[0].mxu0
    %1172 = vmatprep.mubr.bf16.mxu0 0
    %1173 = vmatmul.mubr.bf16.gmra.mrb[0].mxu0 %v1061
    %v1174 = vpop.f32.mrb[0].mxu0
    %v1175 = vadd.f32 0.0, %v1174
    %v1176 = vpop.f32.mrb[0].mxu0
    %v1177 = vpop.f32.mrb[0].mxu0
    %v1178 = vadd.f32 0.0, %v1177
    %v1179 = vpop.f32.mrb[0].mxu0
    %1180 = vmatprep.mubr.bf16.mxu0 0
    %1181 = vmatmul.mubr.bf16.gmra.mrb[0].mxu0 %v1062
    %v1182 = vpop.f32.mrb[0].mxu0
    %v1183 = vadd.f32 0.0, %v1182
    %v1184 = vpop.f32.mrb[0].mxu0
    %v1185 = vpop.f32.mrb[0].mxu0
    %v1186 = vadd.f32 0.0, %v1185
    %v1187 = vpop.f32.mrb[0].mxu0
    %1188 = vmatprep.mubr.bf16.mxu0 0
    %1189 = vmatmul.mubr.bf16.gmra.mrb[0].mxu0 %v1063
    %v1190 = vpop.f32.mrb[0].mxu0
    %v1191 = vadd.f32 0.0, %v1190
    %v1192 = vpop.f32.mrb[0].mxu0
    %v1193 = vpop.f32.mrb[0].mxu0
    %v1194 = vadd.f32 0.0, %v1193
    %v1195 = vpop.f32.mrb[0].mxu0
    %1196 = vmatprep.mubr.bf16.mxu0 0
    %1197 = vmatmul.mubr.bf16.gmra.mrb[0].mxu0 %v1064
    %v1198 = vpop.f32.mrb[0].mxu0
    %v1199 = vadd.f32 0.0, %v1198
    %v1200 = vpop.f32.mrb[0].mxu0
    %v1201 = vpop.f32.mrb[0].mxu0
    %v1202 = vadd.f32 0.0, %v1201
    %v1203 = vpop.f32.mrb[0].mxu0
    %1204 = vmatprep.mubr.bf16.mxu0 0
    %1205 = vmatmul.mubr.bf16.gmra.mrb[0].mxu0 %v1065
    %v1206 = vpop.f32.mrb[0].mxu0
    %v1207 = vadd.f32 0.0, %v1206
    %v1208 = vpop.f32.mrb[0].mxu0
    %v1209 = vpop.f32.mrb[0].mxu0
    %v1210 = vadd.f32 0.0, %v1209
    %v1211 = vpop.f32.mrb[0].mxu0
    %1212 = vmatprep.mubr.bf16.mxu0 0
    %1213 = vmatmul.mubr.bf16.gmra.mrb[0].mxu0 %v1066
    %v1214 = vpop.f32.mrb[0].mxu0
    %v1215 = vadd.f32 0.0, %v1214
    %v1216 = vpop.f32.mrb[0].mxu0
    %v1217 = vpop.f32.mrb[0].mxu0
    %v1218 = vadd.f32 0.0, %v1217
    %v1219 = vpop.f32.mrb[0].mxu0
    %1220 = vmatprep.mubr.bf16.mxu0 0
    %1221 = vmatmul.mubr.bf16.gmra.mrb[0].mxu0 %v1067
    %v1222 = vpop.f32.mrb[0].mxu0
    %v1223 = vadd.f32 0.0, %v1222
    %v1224 = vpop.f32.mrb[0].mxu0
    %v1225 = vpop.f32.mrb[0].mxu0
    %v1226 = vadd.f32 0.0, %v1225
    %v1227 = vpop.f32.mrb[0].mxu0
    %1228 = vdwg.mxu0
    %v1229 = vsub.f32 %v1103, %v122
    %v1230 = vsub.f32 %v1106, %v123
    %v1231 = vsub.f32 %v1111, %v124
    %v1232 = vsub.f32 %v1114, %v125
    %v1233 = vsub.f32 %v1119, %v126
    %v1234 = vsub.f32 %v1122, %v127
    %v1235 = vsub.f32 %v1127, %v128
    %v1236 = vsub.f32 %v1130, %v129
    %v1237 = vsub.f32 %v1135, %v130
    %v1238 = vsub.f32 %v1138, %v131
    %v1239 = vsub.f32 %v1143, %v132
    %v1240 = vsub.f32 %v1146, %v133
    %v1241 = vsub.f32 %v1151, %v134
    %v1242 = vsub.f32 %v1154, %v135
    %v1243 = vsub.f32 %v1159, %v136
    %v1244 = vsub.f32 %v1162, %v137
    %v1245 = vsub.f32 %v1167, %v138
    %v1246 = vsub.f32 %v1170, %v139
    %v1247 = vsub.f32 %v1175, %v140
    %v1248 = vsub.f32 %v1178, %v141
    %v1249 = vsub.f32 %v1183, %v142
    %v1250 = vsub.f32 %v1186, %v143
    %v1251 = vsub.f32 %v1191, %v144
    %v1252 = vsub.f32 %v1194, %v145
    %v1253 = vsub.f32 %v1199, %v146
    %v1254 = vsub.f32 %v1202, %v147
    %v1255 = vsub.f32 %v1207, %v148
    %v1256 = vsub.f32 %v1210, %v149
    %v1257 = vsub.f32 %v1215, %v150
    %v1258 = vsub.f32 %v1218, %v151
    %v1259 = vsub.f32 %v1223, %v152
    %v1260 = vsub.f32 %v1226, %v153
    %v1261 = vmul.f32 %v1229, %v1229
    %v1262 = vmul.f32 %v1230, %v1230
    %v1263 = vmul.f32 %v1231, %v1231
    %v1264 = vmul.f32 %v1232, %v1232
    %v1265 = vmul.f32 %v1233, %v1233
    %v1266 = vmul.f32 %v1234, %v1234
    %v1267 = vmul.f32 %v1235, %v1235
    %v1268 = vmul.f32 %v1236, %v1236
    %v1269 = vmul.f32 %v1237, %v1237
    %v1270 = vmul.f32 %v1238, %v1238
    %v1271 = vmul.f32 %v1239, %v1239
    %v1272 = vmul.f32 %v1240, %v1240
    %v1273 = vmul.f32 %v1241, %v1241
    %v1274 = vmul.f32 %v1242, %v1242
    %v1275 = vmul.f32 %v1243, %v1243
    %v1276 = vmul.f32 %v1244, %v1244
    %v1277 = vmul.f32 %v1245, %v1245
    %v1278 = vmul.f32 %v1246, %v1246
    %v1279 = vmul.f32 %v1247, %v1247
    %v1280 = vmul.f32 %v1248, %v1248
    %v1281 = vmul.f32 %v1249, %v1249
    %v1282 = vmul.f32 %v1250, %v1250
    %v1283 = vmul.f32 %v1251, %v1251
    %v1284 = vmul.f32 %v1252, %v1252
    %v1285 = vmul.f32 %v1253, %v1253
    %v1286 = vmul.f32 %v1254, %v1254
    %v1287 = vmul.f32 %v1255, %v1255
    %v1288 = vmul.f32 %v1256, %v1256
    %v1289 = vmul.f32 %v1257, %v1257
    %v1290 = vmul.f32 %v1258, %v1258
    %v1291 = vmul.f32 %v1259, %v1259
    %v1292 = vmul.f32 %v1260, %v1260
    %v1293 = vadd.f32 %v1261, %v1262
    %v1294 = vadd.f32 %v1293, %v1263
    %v1295 = vadd.f32 %v1294, %v1264
    %v1296 = vadd.f32 %v1295, %v1265
    %v1297 = vadd.f32 %v1296, %v1266
    %v1298 = vadd.f32 %v1297, %v1267
    %v1299 = vadd.f32 %v1298, %v1268
    %v1300 = vadd.f32 %v1299, %v1269
    %v1301 = vadd.f32 %v1300, %v1270
    %v1302 = vadd.f32 %v1301, %v1271
    %v1303 = vadd.f32 %v1302, %v1272
    %v1304 = vadd.f32 %v1303, %v1273
    %v1305 = vadd.f32 %v1304, %v1274
    %v1306 = vadd.f32 %v1305, %v1275
    %v1307 = vadd.f32 %v1306, %v1276
    %v1308 = vadd.f32 %v1307, %v1277
    %v1309 = vadd.f32 %v1308, %v1278
    %v1310 = vadd.f32 %v1309, %v1279
    %v1311 = vadd.f32 %v1310, %v1280
    %v1312 = vadd.f32 %v1311, %v1281
    %v1313 = vadd.f32 %v1312, %v1282
    %v1314 = vadd.f32 %v1313, %v1283
    %v1315 = vadd.f32 %v1314, %v1284
    %v1316 = vadd.f32 %v1315, %v1285
    %v1317 = vadd.f32 %v1316, %v1286
    %v1318 = vadd.f32 %v1317, %v1287
    %v1319 = vadd.f32 %v1318, %v1288
    %v1320 = vadd.f32 %v1319, %v1289
    %v1321 = vadd.f32 %v1320, %v1290
    %v1322 = vadd.f32 %v1321, %v1291
    %v1323 = vadd.f32 %v1322, %v1292
    %v1324 = vrot.slane %v1323, 4
    %v1325 = vadd.f32 %v1323, %v1324
    %v1326 = vrot.slane %v1325, 2
    %v1327 = vadd.f32 %v1325, %v1326
    %v1328 = vrot.slane %v1327, 1
    %v1329 = vadd.f32 %v1327, %v1328
    %1330 = vst [vmem:[#allocation11] sm:$0x1] %v1329
    // Predicated region
    $region42: #{tpu_custom_call.1} parent=1 // pred_check
      _
    $region43: #{tpu_custom_call.1} parent=1 // pred_check_branch
      %1332 = sbr.rel (0) target = $region45
    $region44: #{tpu_custom_call.1} parent=1 // pred_region
      %s1334 = ssub.s32 16, 16
      %1335 = vsyncadd [#allocation4], %s1334
      %s1337 = sshll.u32 [#allocation11], 4
      %s1338 = int_to_ptr.vmem [resolvable:$true] %s1337
      %1340 = dma.vmem_to_hbm [thread:$0]  %s1338, 16, %s5, [#allocation4]
    $region45: #{tpu_custom_call.1} parent=1 // pred_fallthru
      _
    // Predicated region
    $region46: #{tpu_custom_call.1} parent=1 // pred_check
      _
    $region47: #{tpu_custom_call.1} parent=1 // pred_check_branch
      %1342 = sbr.rel (0) target = $region49
    $region48: #{tpu_custom_call.1} parent=1 // pred_region
      %1343 = dma.done [#allocation4], 16
    $region49: #{tpu_custom_call.1} parent=1 // pred_fallthru
      _
    %1344 = vsyncpa [#allocation3], 1
    %1345 = vsyncpa [#allocation6], 1
    %1346 = vsyncpa [#allocation9], 1
    %1347 = vsyncpa [#allocation4], 1

</llo_original>
